<compile_context>
chip_gen: v7x
topology: tpu7x:2x2x1
jax: 0.10.0
libtpu: 0.0.40
codegen_flags: <defaults>
</compile_context>

<pallas_src>
import functools

import jax
import jax.numpy as jnp
from jax.experimental import pallas as pl
from jax.experimental.pallas import tpu as pltpu


def _cross_attention_kernel(*refs, heads, has_mask):
    if has_mask:
        q_ref, kt_ref, v_ref, bias_ref, wo_ref, bo_ref, out_ref = refs
    else:
        q_ref, kt_ref, v_ref, wo_ref, bo_ref, out_ref = refs
        bias_ref = None

    qh = q_ref[0]                                   # (H, TN, d), scale pre-folded
    kT = kt_ref[0]                                  # (H, d, M)  head-major K^T
    vh = v_ref[0]                                   # (H, M, d)

    # Batched-over-heads QK^T in the MXU-natural form (contract d: lhs minor /
    # rhs sublane), f32 accumulate.
    sim = jnp.einsum('hnd,hdm->hnm', qh, kT,
                     preferred_element_type=jnp.float32)      # (H, TN, M) f32
    if has_mask:
        sim = sim + bias_ref[0][None, :, :]                   # additive bias (finite)

    # Numerically-stable softmax along keys.
    smax = jnp.max(sim, axis=-1, keepdims=True)               # (H, TN, 1)
    e = jnp.exp(sim - smax)
    denom = jnp.sum(e, axis=-1, keepdims=True)                # (H, TN, 1)
    inv = pl.reciprocal(denom, approx=False)                  # exact for f32 output

    # PV in native dtype, f32 accumulate; fold 1/denom into the small (H,TN,d)
    # head output rather than dividing the (H,TN,M) matrix.
    o = jnp.einsum('hnm,hmd->hnd', e.astype(vh.dtype), vh,
                   preferred_element_type=jnp.float32)        # (H, TN, d) f32
    o = (o * inv).astype(qh.dtype)

    # Output projection per head (wo pre-split to (H, d, Dq)) -> no head-merge
    # transpose/reshape relayout inside the kernel.
    y = jnp.dot(o[0], wo_ref[0], preferred_element_type=jnp.float32)
    for h in range(1, heads):
        y = y + jnp.dot(o[h], wo_ref[h], preferred_element_type=jnp.float32)
    y = y + bo_ref[...]                                       # (1, Dq) f32 broadcast
    out_ref[0] = y.astype(out_ref.dtype)


def _vmem_limit_bytes():
    # ~25% headroom for Mosaic internal scratch / double-buffers; works for both
    # 128 MiB (v5e/v6e) and 64 MiB (v7x) parts instead of a hardcoded 64 MiB.
    try:
        return int(pltpu.get_tpu_info().vmem_capacity_bytes * 3 // 4)
    except Exception:
        return None


def cross_attention(x, wq, wk, wv, wo, bo, context=None, mask=None, *,
                    heads, dim_head, block_n=256):
    """Pallas implementation of CrossAttention.forward.

    wq/wk/wv: (inner, in_dim) like torch nn.Linear.weight; wo: (query_dim, inner);
    bo: (query_dim,). mask: (B, M) bool/int, True/1 = attend. Output (B, N, query_dim).
    """
    B, N, Dq = x.shape
    ctx = x if context is None else context
    M, Dc = ctx.shape[1], ctx.shape[2]
    inner = heads * dim_head
    scale = dim_head ** (-0.5)
    dtype = x.dtype

    tn = N if N <= block_n else block_n
    assert N % tn == 0, "query length must be divisible by the query tile size"
    n_tiles = N // tn

    # ---- Hoisted projections (plain XLA GEMMs; layout plumbing done once here,
    #      outside the pipelined kernel).  Softmax scale folded into wq.
    q = x @ (wq.T * scale).astype(dtype)                              # (B, N, inner)
    k = ctx @ wk.T                                                    # (B, M, inner)
    v = ctx @ wv.T                                                    # (B, M, inner)
    qh = q.reshape(B, N, heads, dim_head).transpose(0, 2, 1, 3)       # (B, H, N, d)
    kT = k.reshape(B, M, heads, dim_head).transpose(0, 2, 3, 1)       # (B, H, d, M)
    vh = v.reshape(B, M, heads, dim_head).transpose(0, 2, 1, 3)       # (B, H, M, d)

    wo_h = wo.T.reshape(heads, dim_head, Dq)                          # (H, d, Dq)
    bo2 = bo.reshape(1, Dq).astype(jnp.float32)

    has_mask = mask is not None

    operands = [qh, kT, vh]
    in_specs = [
        pl.BlockSpec((1, heads, tn, dim_head), lambda b, n: (b, 0, n, 0)),   # Q tile
        pl.BlockSpec((1, heads, dim_head, M), lambda b, n: (b, 0, 0, 0)),    # K^T (per batch)
        pl.BlockSpec((1, heads, M, dim_head), lambda b, n: (b, 0, 0, 0)),    # V   (per batch)
    ]
    if has_mask:
        keep = mask.reshape(B, -1).astype(bool)
        bias = jnp.where(keep, 0.0, -1e30).astype(jnp.float32).reshape(B, 1, M)
        operands.append(bias)
        in_specs.append(pl.BlockSpec((1, 1, M), lambda b, n: (b, 0, 0)))     # additive bias
    operands += [wo_h, bo2]
    in_specs += [
        pl.BlockSpec((heads, dim_head, Dq), lambda b, n: (0, 0, 0)),         # wo per head
        pl.BlockSpec((1, Dq), lambda b, n: (0, 0)),                          # bo
    ]

    kernel = functools.partial(_cross_attention_kernel, heads=heads, has_mask=has_mask)

    itemsize = jnp.dtype(dtype).itemsize
    flops = 4 * B * N * M * inner + 2 * B * N * inner * Dq     # QK^T + PV + out proj
    transcendentals = B * heads * N * M                        # exp
    bytes_accessed = itemsize * (qh.size + kT.size + vh.size + B * N * Dq
                                 + wo_h.size) + 4 * bo2.size \
                     + (4 * B * M if has_mask else 0)

    return pl.pallas_call(
        kernel,
        out_shape=jax.ShapeDtypeStruct((B, N, Dq), dtype),
        grid_spec=pltpu.PrefetchScalarGridSpec(
            num_scalar_prefetch=0,
            grid=(B, n_tiles),
            in_specs=in_specs,
            out_specs=pl.BlockSpec((1, tn, Dq), lambda b, n: (b, n, 0)),
        ),
        compiler_params=pltpu.CompilerParams(
            # No cross-tile carry -> both axes shardable across cores.
            dimension_semantics=("parallel", "parallel"),
            vmem_limit_bytes=_vmem_limit_bytes(),
        ),
        cost_estimate=pl.CostEstimate(flops=flops,
                                      transcendentals=transcendentals,
                                      bytes_accessed=bytes_accessed),
    )(*operands)


def _reference(x, wq, wk, wv, wo, bo, context, mask, heads, dim_head):
    """Pure-JAX reference mirroring the PyTorch forward."""
    B, N, _ = x.shape
    ctx = x if context is None else context
    M = ctx.shape[1]
    scale = dim_head ** (-0.5)
    q = x @ wq.T
    k = ctx @ wk.T
    v = ctx @ wv.T

    def split(t):
        b, n, _ = t.shape
        return t.reshape(b, n, heads, dim_head).transpose(0, 2, 1, 3).reshape(b * heads, n, dim_head)

    q, k, v = map(split, (q, k, v))
    sim = jnp.einsum('bid,bjd->bij', q, k) * scale
    if mask is not None:
        m = mask.reshape(B, -1)
        m = jnp.repeat(m[:, None, None, :], heads, axis=1).reshape(B * heads, 1, M)
        sim = jnp.where(m != 0, sim, -jnp.finfo(sim.dtype).max)
    attn = jax.nn.softmax(sim, axis=-1)
    out = jnp.einsum('bij,bjd->bid', attn, v)
    out = out.reshape(B, heads, N, dim_head).transpose(0, 2, 1, 3).reshape(B, N, heads * dim_head)
    return out @ wo.T + bo


if __name__ == "__main__":
    # Small, module-consistent shapes.
    B, N, M = 2, 8, 8
    query_dim, context_dim = 32, 32
    heads, dim_head = 2, 16
    inner = heads * dim_head

    key = jax.random.PRNGKey(0)
    ks = jax.random.split(key, 8)
    x = jax.random.normal(ks[0], (B, N, query_dim), dtype=jnp.float32)
    context = jax.random.normal(ks[1], (B, M, context_dim), dtype=jnp.float32)
    wq = jax.random.normal(ks[2], (inner, query_dim), dtype=jnp.float32) * 0.1
    wk = jax.random.normal(ks[3], (inner, context_dim), dtype=jnp.float32) * 0.1
    wv = jax.random.normal(ks[4], (inner, context_dim), dtype=jnp.float32) * 0.1
    wo = jax.random.normal(ks[5], (query_dim, inner), dtype=jnp.float32) * 0.1
    bo = jax.random.normal(ks[6], (query_dim,), dtype=jnp.float32) * 0.1
    # Boolean key-padding mask (True = attend), exercises the masked_fill path.
    mask = jax.random.bernoulli(ks[7], p=0.8, shape=(B, M))
    mask = mask.at[:, 0].set(True)  # keep at least one valid key per batch

    # --- masked cross-attention path ---
    out = cross_attention(x, wq, wk, wv, wo, bo, context=context, mask=mask,
                          heads=heads, dim_head=dim_head)
    out = jax.block_until_ready(out)
    ref = _reference(x, wq, wk, wv, wo, bo, context, mask, heads, dim_head)
    assert out.shape == (B, N, query_dim)
    err = jnp.max(jnp.abs(out - ref))
    assert jnp.allclose(out, ref, atol=2e-4, rtol=2e-4), f"max abs err {err}"

    # --- unmasked self-attention path (mask/bias code compiled out) ---
    out2 = cross_attention(x, wq, wk, wv, wo, bo, context=None, mask=None,
                           heads=heads, dim_head=dim_head)
    out2 = jax.block_until_ready(out2)
    ref2 = _reference(x, wq, wk, wv, wo, bo, None, None, heads, dim_head)
    err2 = jnp.max(jnp.abs(out2 - ref2))
    assert jnp.allclose(out2, ref2, atol=2e-4, rtol=2e-4), f"max abs err {err2}"

    print("KERNEL_OK")
</pallas_src>

<mosaic_0001>
module attributes {stable_mosaic.version = 11 : i64} {
  func.func @_cross_attention_kernel(%arg0: i32, %arg1: i32, %arg2: memref<1x2x8x16xf32, #tpu.memory_space<vmem>>, %arg3: memref<1x2x16x8xf32, #tpu.memory_space<vmem>>, %arg4: memref<1x2x8x16xf32, #tpu.memory_space<vmem>>, %arg5: memref<1x1x8xf32, #tpu.memory_space<vmem>>, %arg6: memref<2x16x32xf32, #tpu.memory_space<vmem>>, %arg7: memref<1x32xf32, #tpu.memory_space<vmem>>, %arg8: memref<1x8x32xf32, #tpu.memory_space<vmem>>) attributes {dimension_semantics = [#tpu.dimension_semantics<parallel>, #tpu.dimension_semantics<parallel>], iteration_bounds = array<i64: 2, 1>, scalar_prefetch = 0 : i64, scratch_operands = 0 : i64, tpu.core_type = #tpu.core_type<tc>, window_params = [{transform_indices = @transform_0, window_bounds = array<i64: 1, 2, 8, 16>}, {transform_indices = @transform_1, window_bounds = array<i64: 1, 2, 16, 8>}, {transform_indices = @transform_2, window_bounds = array<i64: 1, 2, 8, 16>}, {transform_indices = @transform_3, window_bounds = array<i64: 1, 1, 8>}, {pipeline_mode = #tpu.pipeline_mode<synchronous>, transform_indices = @transform_4, window_bounds = array<i64: 2, 16, 32>}, {pipeline_mode = #tpu.pipeline_mode<synchronous>, transform_indices = @transform_5, window_bounds = array<i64: 1, 32>}, {transform_indices = @transform_6, window_bounds = array<i64: 1, 8, 32>}]} {
    %c0 = arith.constant 0 : index
    %c0_0 = arith.constant 0 : index
    %c0_1 = arith.constant 0 : index
    %c0_2 = arith.constant 0 : index
    %0 = vector.load %arg2[%c0, %c0_0, %c0_1, %c0_2] : memref<1x2x8x16xf32, #tpu.memory_space<vmem>>, vector<1x2x8x16xf32>
    %1 = vector.shape_cast %0 : vector<1x2x8x16xf32> to vector<2x8x16xf32>
    %c0_3 = arith.constant 0 : index
    %c0_4 = arith.constant 0 : index
    %c0_5 = arith.constant 0 : index
    %c0_6 = arith.constant 0 : index
    %2 = vector.load %arg3[%c0_3, %c0_4, %c0_5, %c0_6] : memref<1x2x16x8xf32, #tpu.memory_space<vmem>>, vector<1x2x16x8xf32>
    %3 = vector.shape_cast %2 : vector<1x2x16x8xf32> to vector<2x16x8xf32>
    %c0_7 = arith.constant 0 : index
    %c0_8 = arith.constant 0 : index
    %c0_9 = arith.constant 0 : index
    %c0_10 = arith.constant 0 : index
    %4 = vector.load %arg4[%c0_7, %c0_8, %c0_9, %c0_10] : memref<1x2x8x16xf32, #tpu.memory_space<vmem>>, vector<1x2x8x16xf32>
    %5 = vector.shape_cast %4 : vector<1x2x8x16xf32> to vector<2x8x16xf32>
    "tpu.trace_start"() <{level = 10 : i32, message = "hnd,hdm->hnm"}> : () -> ()
    %cst = arith.constant dense<0.000000e+00> : vector<2x8x8xf32>
    %6 = tpu.matmul %1, %3, %cst {dimension_numbers = #tpu.dot_dimension_numbers<[2], [1], [1], [2], [0, 0, 0, 1, 1, 2], [0], [0]>} : vector<2x8x16xf32>, vector<2x16x8xf32>, vector<2x8x8xf32> -> vector<2x8x8xf32>
    "tpu.trace_stop"() : () -> ()
    %c0_11 = arith.constant 0 : index
    %c0_12 = arith.constant 0 : index
    %c0_13 = arith.constant 0 : index
    %7 = vector.load %arg5[%c0_11, %c0_12, %c0_13] : memref<1x1x8xf32, #tpu.memory_space<vmem>>, vector<1x1x8xf32>
    %8 = vector.shape_cast %7 : vector<1x1x8xf32> to vector<1x8xf32>
    %9 = vector.shape_cast %8 : vector<1x8xf32> to vector<1x1x8xf32>
    %10 = vector.broadcast %9 : vector<1x1x8xf32> to vector<2x8x8xf32>
    %11 = arith.addf %6, %10 : vector<2x8x8xf32>
    %cst_14 = arith.constant dense<0xFF800000> : vector<2x8xf32>
    %12 = vector.multi_reduction <maximumf>, %11, %cst_14 [2] : vector<2x8x8xf32> to vector<2x8xf32>
    %13 = vector.shape_cast %12 : vector<2x8xf32> to vector<2x8x1xf32>
    %14 = vector.broadcast %13 : vector<2x8x1xf32> to vector<2x8x8xf32>
    %15 = arith.subf %11, %14 : vector<2x8x8xf32>
    %16 = math.exp %15 : vector<2x8x8xf32>
    %cst_15 = arith.constant dense<0.000000e+00> : vector<2x8xf32>
    %17 = vector.multi_reduction <add>, %16, %cst_15 [2] : vector<2x8x8xf32> to vector<2x8xf32>
    %18 = vector.shape_cast %17 : vector<2x8xf32> to vector<2x8x1xf32>
    %19 = tpu.reciprocal %18 : vector<2x8x1xf32> -> vector<2x8x1xf32>
    "tpu.trace_start"() <{level = 10 : i32, message = "hnm,hmd->hnd"}> : () -> ()
    %cst_16 = arith.constant dense<0.000000e+00> : vector<2x8x16xf32>
    %20 = tpu.matmul %16, %5, %cst_16 {dimension_numbers = #tpu.dot_dimension_numbers<[2], [1], [1], [2], [0, 0, 0, 1, 1, 2], [0], [0]>} : vector<2x8x8xf32>, vector<2x8x16xf32>, vector<2x8x16xf32> -> vector<2x8x16xf32>
    "tpu.trace_stop"() : () -> ()
    %21 = vector.broadcast %19 : vector<2x8x1xf32> to vector<2x8x16xf32>
    %22 = arith.mulf %20, %21 : vector<2x8x16xf32>
    %23 = vector.extract_strided_slice %22 {offsets = [0, 0, 0], sizes = [1, 8, 16], strides = [1, 1, 1]} : vector<2x8x16xf32> to vector<1x8x16xf32>
    %24 = vector.shape_cast %23 : vector<1x8x16xf32> to vector<8x16xf32>
    %c0_17 = arith.constant 0 : index
    %c0_18 = arith.constant 0 : index
    %c0_19 = arith.constant 0 : index
    %25 = vector.load %arg6[%c0_17, %c0_18, %c0_19] : memref<2x16x32xf32, #tpu.memory_space<vmem>>, vector<1x16x32xf32>
    %26 = vector.shape_cast %25 : vector<1x16x32xf32> to vector<16x32xf32>
    %cst_20 = arith.constant dense<0.000000e+00> : vector<8x32xf32>
    %27 = tpu.matmul %24, %26, %cst_20 {dimension_numbers = #tpu.dot_dimension_numbers<[1], [0], [0], [1], [0, 0, 1, 1], [], []>} : vector<8x16xf32>, vector<16x32xf32>, vector<8x32xf32> -> vector<8x32xf32>
    %28 = vector.extract_strided_slice %22 {offsets = [1, 0, 0], sizes = [1, 8, 16], strides = [1, 1, 1]} : vector<2x8x16xf32> to vector<1x8x16xf32>
    %29 = vector.shape_cast %28 : vector<1x8x16xf32> to vector<8x16xf32>
    %c1 = arith.constant 1 : index
    %c0_21 = arith.constant 0 : index
    %c0_22 = arith.constant 0 : index
    %30 = vector.load %arg6[%c1, %c0_21, %c0_22] : memref<2x16x32xf32, #tpu.memory_space<vmem>>, vector<1x16x32xf32>
    %31 = vector.shape_cast %30 : vector<1x16x32xf32> to vector<16x32xf32>
    %cst_23 = arith.constant dense<0.000000e+00> : vector<8x32xf32>
    %32 = tpu.matmul %29, %31, %cst_23 {dimension_numbers = #tpu.dot_dimension_numbers<[1], [0], [0], [1], [0, 0, 1, 1], [], []>} : vector<8x16xf32>, vector<16x32xf32>, vector<8x32xf32> -> vector<8x32xf32>
    %33 = arith.addf %27, %32 : vector<8x32xf32>
    %c0_24 = arith.constant 0 : index
    %c0_25 = arith.constant 0 : index
    %34 = vector.load %arg7[%c0_24, %c0_25] : memref<1x32xf32, #tpu.memory_space<vmem>>, vector<1x32xf32>
    %35 = vector.broadcast %34 : vector<1x32xf32> to vector<8x32xf32>
    %36 = arith.addf %33, %35 : vector<8x32xf32>
    %c0_26 = arith.constant 0 : index
    %c0_27 = arith.constant 0 : index
    %c0_28 = arith.constant 0 : index
    %37 = vector.load %arg8[%c0_26, %c0_27, %c0_28] : memref<1x8x32xf32, #tpu.memory_space<vmem>>, vector<1x8x32xf32>
    %38 = vector.shape_cast %37 : vector<1x8x32xf32> to vector<8x32xf32>
    %39 = vector.shape_cast %36 : vector<8x32xf32> to vector<1x8x32xf32>
    tpu.vector_store %arg8[%c0_26, %c0_27, %c0_28], %39 {strides = array<i32>} : memref<1x8x32xf32, #tpu.memory_space<vmem>>, vector<1x8x32xf32>,
    return
  }
  func.func @transform_0(%arg0: i32, %arg1: i32) -> (i32, i32, i32, i32) {
    %c0_i32 = arith.constant 0 : i32
    %c0_i32_0 = arith.constant 0 : i32
    %c0_i32_1 = arith.constant 0 : i32
    return %arg0, %c0_i32, %arg1, %c0_i32_0 : i32, i32, i32, i32
  }
  func.func @transform_1(%arg0: i32, %arg1: i32) -> (i32, i32, i32, i32) {
    %c0_i32 = arith.constant 0 : i32
    %c0_i32_0 = arith.constant 0 : i32
    %c0_i32_1 = arith.constant 0 : i32
    %c0_i32_2 = arith.constant 0 : i32
    return %arg0, %c0_i32, %c0_i32_0, %c0_i32_1 : i32, i32, i32, i32
  }
  func.func @transform_2(%arg0: i32, %arg1: i32) -> (i32, i32, i32, i32) {
    %c0_i32 = arith.constant 0 : i32
    %c0_i32_0 = arith.constant 0 : i32
    %c0_i32_1 = arith.constant 0 : i32
    %c0_i32_2 = arith.constant 0 : i32
    return %arg0, %c0_i32, %c0_i32_0, %c0_i32_1 : i32, i32, i32, i32
  }
  func.func @transform_3(%arg0: i32, %arg1: i32) -> (i32, i32, i32) {
    %c0_i32 = arith.constant 0 : i32
    %c0_i32_0 = arith.constant 0 : i32
    %c0_i32_1 = arith.constant 0 : i32
    return %arg0, %c0_i32, %c0_i32_0 : i32, i32, i32
  }
  func.func @transform_4(%arg0: i32, %arg1: i32) -> (i32, i32, i32) {
    %c0_i32 = arith.constant 0 : i32
    %c0_i32_0 = arith.constant 0 : i32
    %c0_i32_1 = arith.constant 0 : i32
    %c0_i32_2 = arith.constant 0 : i32
    return %c0_i32, %c0_i32_0, %c0_i32_1 : i32, i32, i32
  }
  func.func @transform_5(%arg0: i32, %arg1: i32) -> (i32, i32) {
    %c0_i32 = arith.constant 0 : i32
    %c0_i32_0 = arith.constant 0 : i32
    %c0_i32_1 = arith.constant 0 : i32
    return %c0_i32, %c0_i32_0 : i32, i32
  }
  func.func @transform_6(%arg0: i32, %arg1: i32) -> (i32, i32, i32) {
    %c0_i32 = arith.constant 0 : i32
    %c0_i32_0 = arith.constant 0 : i32
    return %arg0, %arg1, %c0_i32 : i32, i32, i32
  }
}

</mosaic_0001>

<llo_original>
// kernel: tpu_custom_call.1
$region0: #{tpu_custom_call.1}
  #allocation0 [shape = 'u32[]', space=smem, size = 0x4, offset = 0x4, fixed_abs, tag = 'smem constant byte address 0x4 - core index']
  #allocation1 [shape = 'u32[144,128]{1,0:T(1,128)}', space=vmem, size = 0x12000, scoped, tag = 'internal scratch']
  %s0 = inlined_call_operand.vmem [shape: f32[2,2,8,16], index: 0, kind: input, shape index: {}]
  %s1 = inlined_call_operand.vmem [shape: f32[2,2,16,8], index: 1, kind: input, shape index: {}]
  %s2 = inlined_call_operand.vmem [shape: f32[2,2,8,16], index: 2, kind: input, shape index: {}]
  %s3 = inlined_call_operand.vmem [shape: f32[2,1,8], index: 3, kind: input, shape index: {}]
  %s4 = inlined_call_operand.vmem [shape: f32[2,16,32], index: 4, kind: input, shape index: {}]
  %s5 = inlined_call_operand.vmem [shape: f32[1,32], index: 5, kind: input, shape index: {}]
  %s6 = inlined_call_operand.hbm [shape: f32[2,8,32], index: 6, kind: output, shape index: {}]
  %s7 = sld [smem:[#allocation0]]
  $region57: #{tpu_custom_call.1} parent=0
    _
  %s9 = ssub.s32 1, %s7
  %s10 = scalar_select 0, %s9, %s7
  $region1: #{tpu_custom_call.1} parent=0
    #allocation2 [shape = 'u8[8192]{0}', space=vmem, size = 0x2000, scoped, tag = 'output window, operand 0']
    #allocation3 [shape = 's32[2]{0}', space=sflag, size = 0x8, scoped, tag = 'scoped memory for tpu_custom_call.1']
    %11 = vsyncpa [#allocation3], 0
    %s12 = scalar_lea.sflag [#allocation3], 1
    %13 = vsyncpa %s12, 0
    loop: start=0, step=1, limit=4
    $region2: #{tpu_custom_call.1} parent=1 // loop_pre_header
      _
    $region3: #{tpu_custom_call.1} parent=1 // loop_header
      %s15 = sphi 0, %s19
      %p16 = scmp.ge.s32.totalorder %s15, 4
      %s22 = sphi 0, %s34
      %s23 = sphi 0, %s30
      %s24 = sphi 0, %s22
      %s25 = sphi 0, %s23
      %s26 = sphi 0, %s24
      %s27 = sphi 0, %s25
      %s39 = sphi 0, %s41
      %s42 = sphi 0, %s39
      %s43 = sphi 0, %s42
      %s59 = sphi 0, %s43
      %s65 = sphi 0, %s67
      %s68 = sphi 0, %s65
      %s69 = sphi 0, %s68
      %s85 = sphi 0, %s69
      %s91 = sphi 0, %s93
      %s94 = sphi 0, %s91
      %s95 = sphi 0, %s94
      %s111 = sphi 0, %s95
      %s117 = sphi 0, %s119
      %s120 = sphi 0, %s117
      %s121 = sphi 0, %s120
      %s137 = sphi 0, %s121
      %s141 = sphi 0, %s141
      %s143 = sphi 0, %s141
      %s144 = sphi 0, %s143
      %s158 = sphi 0, %s144
      %s162 = sphi 0, %s162
      %s164 = sphi 0, %s162
      %s165 = sphi 0, %s164
      %s179 = sphi 0, %s165
      %s187 = sphi 0, %s189
      %s190 = sphi 0, %s187
      %s191 = sphi 0, %s190
      %s207 = sphi 0, %s191
    $region4: #{tpu_custom_call.1} parent=1 // loop_header_branch
      %18 = sbr.rel (%p16) target = $region8
    $region5: #{tpu_custom_call.1} parent=1 // loop_body
      %s20 = ssub.s32 %s15, 1
      %s21 = ssub.s32 %s15, 2
      %s28 = sadd.s32 1, %s23
      %p29 = scmp.ge.s32.totalorder %s28, 1
      %s30 = scalar_select %p29, 0, %s28
      %s31 = sadd.s32 1, %s22
      %s32 = scalar_select %p29, %s31, %s22
      %p33 = scmp.ge.s32.totalorder %s32, 2
      %s34 = scalar_select %p33, 0, %s32
      %s35 = ssub.s32 %s22, %s34
      %s36 = ssub.s32 %s23, %s30
      %s37 = sor.u32 %s35, %s36
      %p38 = scmp.eq.s32.totalorder %s37, 0
      %s40 = sadd.s32 %s39, 1
      %s41 = scalar_select %p38, %s39, %s40
      %p44 = pneg %p38
      %p45 = scmp.eq.s32.totalorder %s15, 1
      %p46 = por %p44, %p45
      %p47 = scmp.ne.s32.totalorder %s39, %s42
      %p48 = scmp.eq.s32.totalorder %s15, 0
      %p49 = por %p47, %p48
      %p50 = scmp.ne.s32.totalorder %s39, %s42
      %p51 = scmp.eq.s32.totalorder %s20, 1
      %p52 = por %p50, %p51
      %p53 = scmp.ne.s32.totalorder %s42, %s43
      %p54 = scmp.eq.s32.totalorder %s20, 0
      %p55 = por %p53, %p54
      %p56 = scmp.ne.s32.totalorder %s42, %s43
      %p57 = scmp.eq.s32.totalorder %s21, 1
      %p58 = por %p56, %p57
      %p60 = scmp.ne.s32.totalorder %s43, %s59
      %p61 = scmp.eq.s32.totalorder %s21, 0
      %p62 = por %p60, %p61
      %s63 = ssub.s32 %s22, %s34
      %p64 = scmp.eq.s32.totalorder %s63, 0
      %s66 = sadd.s32 %s65, 1
      %s67 = scalar_select %p64, %s65, %s66
      %p70 = pneg %p64
      %p71 = scmp.eq.s32.totalorder %s15, 1
      %p72 = por %p70, %p71
      %p73 = scmp.ne.s32.totalorder %s65, %s68
      %p74 = scmp.eq.s32.totalorder %s15, 0
      %p75 = por %p73, %p74
      %p76 = scmp.ne.s32.totalorder %s65, %s68
      %p77 = scmp.eq.s32.totalorder %s20, 1
      %p78 = por %p76, %p77
      %p79 = scmp.ne.s32.totalorder %s68, %s69
      %p80 = scmp.eq.s32.totalorder %s20, 0
      %p81 = por %p79, %p80
      %p82 = scmp.ne.s32.totalorder %s68, %s69
      %p83 = scmp.eq.s32.totalorder %s21, 1
      %p84 = por %p82, %p83
      %p86 = scmp.ne.s32.totalorder %s69, %s85
      %p87 = scmp.eq.s32.totalorder %s21, 0
      %p88 = por %p86, %p87
      %s89 = ssub.s32 %s22, %s34
      %p90 = scmp.eq.s32.totalorder %s89, 0
      %s92 = sadd.s32 %s91, 1
      %s93 = scalar_select %p90, %s91, %s92
      %p96 = pneg %p90
      %p97 = scmp.eq.s32.totalorder %s15, 1
      %p98 = por %p96, %p97
      %p99 = scmp.ne.s32.totalorder %s91, %s94
      %p100 = scmp.eq.s32.totalorder %s15, 0
      %p101 = por %p99, %p100
      %p102 = scmp.ne.s32.totalorder %s91, %s94
      %p103 = scmp.eq.s32.totalorder %s20, 1
      %p104 = por %p102, %p103
      %p105 = scmp.ne.s32.totalorder %s94, %s95
      %p106 = scmp.eq.s32.totalorder %s20, 0
      %p107 = por %p105, %p106
      %p108 = scmp.ne.s32.totalorder %s94, %s95
      %p109 = scmp.eq.s32.totalorder %s21, 1
      %p110 = por %p108, %p109
      %p112 = scmp.ne.s32.totalorder %s95, %s111
      %p113 = scmp.eq.s32.totalorder %s21, 0
      %p114 = por %p112, %p113
      %s115 = ssub.s32 %s22, %s34
      %p116 = scmp.eq.s32.totalorder %s115, 0
      %s118 = sadd.s32 %s117, 1
      %s119 = scalar_select %p116, %s117, %s118
      %p122 = pneg %p116
      %p123 = scmp.eq.s32.totalorder %s15, 1
      %p124 = por %p122, %p123
      %p125 = scmp.ne.s32.totalorder %s117, %s120
      %p126 = scmp.eq.s32.totalorder %s15, 0
      %p127 = por %p125, %p126
      %p128 = scmp.ne.s32.totalorder %s117, %s120
      %p129 = scmp.eq.s32.totalorder %s20, 1
      %p130 = por %p128, %p129
      %p131 = scmp.ne.s32.totalorder %s120, %s121
      %p132 = scmp.eq.s32.totalorder %s20, 0
      %p133 = por %p131, %p132
      %p134 = scmp.ne.s32.totalorder %s120, %s121
      %p135 = scmp.eq.s32.totalorder %s21, 1
      %p136 = por %p134, %p135
      %p138 = scmp.ne.s32.totalorder %s121, %s137
      %p139 = scmp.eq.s32.totalorder %s21, 0
      %p140 = por %p138, %p139
      %s142 = sadd.s32 %s141, 1
      %p145 = scmp.eq.s32.totalorder %s15, 1
      %p146 = scmp.ne.s32.totalorder %s141, %s143
      %p147 = scmp.eq.s32.totalorder %s15, 0
      %p148 = por %p146, %p147
      %p149 = scmp.ne.s32.totalorder %s141, %s143
      %p150 = scmp.eq.s32.totalorder %s20, 1
      %p151 = por %p149, %p150
      %p152 = scmp.ne.s32.totalorder %s143, %s144
      %p153 = scmp.eq.s32.totalorder %s20, 0
      %p154 = por %p152, %p153
      %p155 = scmp.ne.s32.totalorder %s143, %s144
      %p156 = scmp.eq.s32.totalorder %s21, 1
      %p157 = por %p155, %p156
      %p159 = scmp.ne.s32.totalorder %s144, %s158
      %p160 = scmp.eq.s32.totalorder %s21, 0
      %p161 = por %p159, %p160
      %s163 = sadd.s32 %s162, 1
      %p166 = scmp.eq.s32.totalorder %s15, 1
      %p167 = scmp.ne.s32.totalorder %s162, %s164
      %p168 = scmp.eq.s32.totalorder %s15, 0
      %p169 = por %p167, %p168
      %p170 = scmp.ne.s32.totalorder %s162, %s164
      %p171 = scmp.eq.s32.totalorder %s20, 1
      %p172 = por %p170, %p171
      %p173 = scmp.ne.s32.totalorder %s164, %s165
      %p174 = scmp.eq.s32.totalorder %s20, 0
      %p175 = por %p173, %p174
      %p176 = scmp.ne.s32.totalorder %s164, %s165
      %p177 = scmp.eq.s32.totalorder %s21, 1
      %p178 = por %p176, %p177
      %p180 = scmp.ne.s32.totalorder %s165, %s179
      %p181 = scmp.eq.s32.totalorder %s21, 0
      %p182 = por %p180, %p181
      %s183 = ssub.s32 %s22, %s34
      %s184 = ssub.s32 %s23, %s30
      %s185 = sor.u32 %s183, %s184
      %p186 = scmp.eq.s32.totalorder %s185, 0
      %s188 = sadd.s32 %s187, 1
      %s189 = scalar_select %p186, %s187, %s188
      %p192 = pneg %p186
      %p193 = scmp.eq.s32.totalorder %s15, 1
      %p194 = por %p192, %p193
      %p195 = scmp.ne.s32.totalorder %s187, %s190
      %p196 = scmp.eq.s32.totalorder %s15, 0
      %p197 = por %p195, %p196
      %p198 = scmp.ne.s32.totalorder %s187, %s190
      %p199 = scmp.eq.s32.totalorder %s20, 1
      %p200 = por %p198, %p199
      %p201 = scmp.ne.s32.totalorder %s190, %s191
      %p202 = scmp.eq.s32.totalorder %s20, 0
      %p203 = por %p201, %p202
      %p204 = scmp.ne.s32.totalorder %s190, %s191
      %p205 = scmp.eq.s32.totalorder %s21, 1
      %p206 = por %p204, %p205
      %p208 = scmp.ne.s32.totalorder %s191, %s207
      %p209 = scmp.eq.s32.totalorder %s21, 0
      %p210 = por %p208, %p209
      %p211 = scmp.le.s32.totalorder 1, %s15
      %p212 = scmp.lt.s32.totalorder %s15, 3
      %p213 = pnand %p211, %p212
      %p214 = pneg %p213
      // Predicated region
      $region9: #{tpu_custom_call.1} parent=5 // pred_check
        _
      $region10: #{tpu_custom_call.1} parent=5 // pred_check_branch
        %216 = sbr.rel (%p213) target = $region12
      $region11: #{tpu_custom_call.1} parent=5 // pred_region
        %s217 = ssub.s32 %s15, 1
        // Predicated region
        $region13: #{tpu_custom_call.1} parent=11 // pred_check
          %p218 = pneg %p154
        $region14: #{tpu_custom_call.1} parent=11 // pred_check_branch
          %220 = sbr.rel (%p218) target = $region16
        $region15: #{tpu_custom_call.1} parent=11 // pred_region
          _
        $region16: #{tpu_custom_call.1} parent=11 // pred_fallthru
          _
        // Predicated region
        $region17: #{tpu_custom_call.1} parent=11 // pred_check
          %p221 = pneg %p175
        $region18: #{tpu_custom_call.1} parent=11 // pred_check_branch
          %223 = sbr.rel (%p221) target = $region20
        $region19: #{tpu_custom_call.1} parent=11 // pred_region
          _
        $region20: #{tpu_custom_call.1} parent=11 // pred_fallthru
          _
      $region12: #{tpu_custom_call.1} parent=5 // pred_fallthru
        _
      %p224 = scmp.lt.s32.totalorder %s15, 2
      // Predicated region
      $region21: #{tpu_custom_call.1} parent=5 // pred_check
        %p225 = pneg %p224
      $region22: #{tpu_custom_call.1} parent=5 // pred_check_branch
        %227 = sbr.rel (%p225) target = $region24
      $region23: #{tpu_custom_call.1} parent=5 // pred_region
        // Predicated region
        $region25: #{tpu_custom_call.1} parent=23 // pred_check
          %p228 = pneg %p49
        $region26: #{tpu_custom_call.1} parent=23 // pred_check_branch
          %230 = sbr.rel (%p228) target = $region28
        $region27: #{tpu_custom_call.1} parent=23 // pred_region
          %p231 = scmp.lt.s32.totalorder %s22, 1
          %s232 = scalar_select %p231, %s22, 1
          %p233 = scmp.lt.s32.totalorder %s23, 0
          %s234 = scalar_select %p233, %s23, 0
          %s235 = smul.addr %s232, 2
          %s236 = sadd.s32 %s234, %s235
          %s237 = smul.addr %s236, 8
          %s238 = scalar_lea.vmem %s0, %s237
        $region28: #{tpu_custom_call.1} parent=23 // pred_fallthru
          _
        // Predicated region
        $region29: #{tpu_custom_call.1} parent=23 // pred_check
          %p239 = pneg %p75
        $region30: #{tpu_custom_call.1} parent=23 // pred_check_branch
          %241 = sbr.rel (%p239) target = $region32
        $region31: #{tpu_custom_call.1} parent=23 // pred_region
          %p242 = scmp.lt.s32.totalorder %s22, 1
          %s243 = scalar_select %p242, %s22, 1
          %s244 = smul.addr %s243, 4
          %s245 = smul.addr %s244, 8
          %s246 = scalar_lea.vmem %s1, %s245
        $region32: #{tpu_custom_call.1} parent=23 // pred_fallthru
          _
        // Predicated region
        $region33: #{tpu_custom_call.1} parent=23 // pred_check
          %p247 = pneg %p101
        $region34: #{tpu_custom_call.1} parent=23 // pred_check_branch
          %249 = sbr.rel (%p247) target = $region36
        $region35: #{tpu_custom_call.1} parent=23 // pred_region
          %p250 = scmp.lt.s32.totalorder %s22, 1
          %s251 = scalar_select %p250, %s22, 1
          %s252 = smul.addr %s251, 2
          %s253 = smul.addr %s252, 8
          %s254 = scalar_lea.vmem %s2, %s253
        $region36: #{tpu_custom_call.1} parent=23 // pred_fallthru
          _
        // Predicated region
        $region37: #{tpu_custom_call.1} parent=23 // pred_check
          %p255 = pneg %p127
        $region38: #{tpu_custom_call.1} parent=23 // pred_check_branch
          %257 = sbr.rel (%p255) target = $region40
        $region39: #{tpu_custom_call.1} parent=23 // pred_region
          %p258 = scmp.lt.s32.totalorder %s22, 1
          %s259 = scalar_select %p258, %s22, 1
          %s260 = scalar_lea.vmem %s3, %s259
        $region40: #{tpu_custom_call.1} parent=23 // pred_fallthru
          _
      $region24: #{tpu_custom_call.1} parent=5 // pred_fallthru
        _
      %p261 = scmp.le.s32.totalorder 1, %s15
      %p262 = scmp.lt.s32.totalorder %s15, 3
      %p263 = pnand %p261, %p262
      %p264 = pneg %p263
      // Predicated region
      $region41: #{tpu_custom_call.1} parent=5 // pred_check
        _
      $region42: #{tpu_custom_call.1} parent=5 // pred_check_branch
        %266 = sbr.rel (%p263) target = $region44
      $region43: #{tpu_custom_call.1} parent=5 // pred_region
        %s267 = ssub.s32 %s15, 1
        %p268 = scmp.lt.s32.totalorder %s24, 1
        %s269 = scalar_select %p268, %s24, 1
        %p270 = scmp.lt.s32.totalorder %s25, 0
        %s271 = scalar_select %p270, %s25, 0
        %s272 = smul.addr %s269, 2
        %s273 = sadd.s32 %s271, %s272
        %s274 = smul.addr %s273, 8
        %s275 = scalar_lea.vmem %s0, %s274
        %p276 = pneg %p55
        %p277 = pneg %p52
        %p278 = scmp.lt.s32.totalorder %s24, 1
        %s279 = scalar_select %p278, %s24, 1
        %s280 = smul.addr %s279, 4
        %s281 = smul.addr %s280, 8
        %s282 = scalar_lea.vmem %s1, %s281
        %p283 = pneg %p81
        %p284 = pneg %p78
        %p285 = scmp.lt.s32.totalorder %s24, 1
        %s286 = scalar_select %p285, %s24, 1
        %s287 = smul.addr %s286, 2
        %s288 = smul.addr %s287, 8
        %s289 = scalar_lea.vmem %s2, %s288
        %p290 = pneg %p107
        %p291 = pneg %p104
        %p292 = scmp.lt.s32.totalorder %s24, 1
        %s293 = scalar_select %p292, %s24, 1
        %s294 = scalar_lea.vmem %s3, %s293
        %p295 = pneg %p133
        %p296 = pneg %p130
        %p297 = pneg %p154
        %p298 = pneg %p151
        %p299 = pneg %p175
        %p300 = pneg %p172
        %p301 = pneg %p203
        %p302 = pneg %p200
        %s303 = sand.u32 %s190, 1
        %s304 = scalar_lea.sflag [#allocation3], %s303
        %s305 = sand.u32 %s190, 1
        %s306 = smul.addr %s305, 8
        %s307 = scalar_lea.vmem [#allocation2], %s306
        %p308 = scmp.lt.s32.totalorder %s24, 1
        %s309 = scalar_select %p308, %s24, 1
        %p310 = scmp.lt.s32.totalorder %s25, 0
        %s311 = scalar_select %p310, %s25, 0
        %s312 = smul.addr %s309, 2
        %s313 = sadd.s32 %s311, %s312
        %s314 = smul.addr %s313, 8
        %s315 = scalar_lea.vmem %s0, %s314
        %p316 = scmp.lt.s32.totalorder %s24, 1
        %s317 = scalar_select %p316, %s24, 1
        %s318 = smul.addr %s317, 4
        %s319 = smul.addr %s318, 8
        %s320 = scalar_lea.vmem %s1, %s319
        %p321 = scmp.lt.s32.totalorder %s24, 1
        %s322 = scalar_select %p321, %s24, 1
        %s323 = smul.addr %s322, 2
        %s324 = smul.addr %s323, 8
        %s325 = scalar_lea.vmem %s2, %s324
        %p326 = scmp.lt.s32.totalorder %s24, 1
        %s327 = scalar_select %p326, %s24, 1
        %s328 = scalar_lea.vmem %s3, %s327
        %v329 = vld [vmem:[%s315] sm:$0xff]
        %v330 = vld [vmem:[%s315 + $0x8] sm:$0xff]
        %v331 = vld [vmem:[%s320] sm:$0xff]
        %v332 = vld [vmem:[%s320 + $0x8] sm:$0xff]
        %v333 = vld [vmem:[%s320 + $0x10] sm:$0xff]
        %v334 = vld [vmem:[%s320 + $0x18] sm:$0xff]
        %v335 = vld [vmem:[%s325] sm:$0xff]
        %v336 = vld [vmem:[%s325 + $0x8] sm:$0xff]
        %v337 = vld [vmem:[%s328] sm:$0x1]
        %v339 = vlaneseq
        %v340 = vshrl.u32 %v339, 7
        %v341 = vsub.s32 0, %v340
        %v342 = vrot.slane %v337, %v341
        %vm344 = vcmask 130048
        %v346 = vsel %vm344, %v329, 0
        %348 = vmatprep.subr.mxu0 0.0
        %349 = vmatpush1.msra.mxu0 %v331
        %350 = vmatprep.subr.mxu0 0.0
        %351 = vmatpush1.msra.mxu0 %v332
        %352 = vmatprep.subr.mxu0 0.0
        %353 = vmatpush1.msra.mxu0 0.0
        %354 = vmatprep.subr.mxu0 0.0
        %355 = vmatpush1.msra.mxu0 0.0
        %356 = vmatprep.subr.mxu0 0.0
        %357 = vmatpush1.msra.mxu0 0.0
        %358 = vmatprep.subr.mxu0 0.0
        %359 = vmatpush1.msra.mxu0 0.0
        %360 = vmatprep.subr.mxu0 0.0
        %361 = vmatpush1.msra.mxu0 0.0
        %362 = vmatprep.subr.mxu0 0.0
        %363 = vmatpush1.msra.mxu0 0.0
        %364 = vmatprep.subr.mxu0 0.0
        %365 = vmatpush1.msra.mxu0 0.0
        %366 = vmatprep.subr.mxu0 0.0
        %367 = vmatpush1.msra.mxu0 0.0
        %368 = vmatprep.subr.mxu0 0.0
        %369 = vmatpush1.msra.mxu0 0.0
        %370 = vmatprep.subr.mxu0 0.0
        %371 = vmatpush1.msra.mxu0 0.0
        %372 = vmatprep.subr.mxu0 0.0
        %373 = vmatpush1.msra.mxu0 0.0
        %374 = vmatprep.subr.mxu0 0.0
        %375 = vmatpush1.msra.mxu0 0.0
        %376 = vmatprep.subr.mxu0 0.0
        %377 = vmatpush1.msra.mxu0 0.0
        %378 = vmatprep.subr.mxu0 0.0
        %379 = vmatpush1.msra.mxu0 0.0
        %380 = vmatprep.subr.mxu0 0.0
        %381 = vmatpush1.msra.mxu0 0.0
        %382 = vmatprep.subr.mxu0 0.0
        %383 = vmatpush1.msra.mxu0 0.0
        %384 = vmatprep.subr.mxu0 0.0
        %385 = vmatpush1.msra.mxu0 0.0
        %386 = vmatprep.subr.mxu0 0.0
        %387 = vmatpush1.msra.mxu0 0.0
        %388 = vmatprep.subr.mxu0 0.0
        %389 = vmatpush1.msra.mxu0 0.0
        %390 = vmatprep.subr.mxu0 0.0
        %391 = vmatpush1.msra.mxu0 0.0
        %392 = vmatprep.subr.mxu0 0.0
        %393 = vmatpush1.msra.mxu0 0.0
        %394 = vmatprep.subr.mxu0 0.0
        %395 = vmatpush1.msra.mxu0 0.0
        %396 = vmatprep.subr.mxu0 0.0
        %397 = vmatpush1.msra.mxu0 0.0
        %398 = vmatprep.subr.mxu0 0.0
        %399 = vmatpush1.msra.mxu0 0.0
        %400 = vmatprep.subr.mxu0 0.0
        %401 = vmatpush1.msra.mxu0 0.0
        %402 = vmatprep.subr.mxu0 0.0
        %403 = vmatpush1.msra.mxu0 0.0
        %404 = vmatprep.subr.mxu0 0.0
        %405 = vmatpush1.msra.mxu0 0.0
        %406 = vmatprep.subr.mxu0 0.0
        %407 = vmatpush1.msra.mxu0 0.0
        %408 = vmatprep.subr.mxu0 0.0
        %409 = vmatpush1.msra.mxu0 0.0
        %410 = vmatprep.subr.mxu0 0.0
        %411 = vmatpush1.msra.mxu0 0.0
        %412 = vmatprep.mubr.f32.mxu0 0.0
        %413 = vmatmul.mubr.f32.gmra.mrb[0].mxu0 %v346
        %v414 = vpop.f32.mrb[0].mxu0
        %v415 = vadd.f32 %v342, %v414
        %v416 = vpop.f32.mrb[0].mxu0
        %417 = vdwg.mxu0
        %v419 = vsel %vm344, %v330, 0
        %421 = vmatprep.subr.mxu0 0.0
        %422 = vmatpush1.msra.mxu0 %v333
        %423 = vmatprep.subr.mxu0 0.0
        %424 = vmatpush1.msra.mxu0 %v334
        %425 = vmatprep.subr.mxu0 0.0
        %426 = vmatpush1.msra.mxu0 0.0
        %427 = vmatprep.subr.mxu0 0.0
        %428 = vmatpush1.msra.mxu0 0.0
        %429 = vmatprep.subr.mxu0 0.0
        %430 = vmatpush1.msra.mxu0 0.0
        %431 = vmatprep.subr.mxu0 0.0
        %432 = vmatpush1.msra.mxu0 0.0
        %433 = vmatprep.subr.mxu0 0.0
        %434 = vmatpush1.msra.mxu0 0.0
        %435 = vmatprep.subr.mxu0 0.0
        %436 = vmatpush1.msra.mxu0 0.0
        %437 = vmatprep.subr.mxu0 0.0
        %438 = vmatpush1.msra.mxu0 0.0
        %439 = vmatprep.subr.mxu0 0.0
        %440 = vmatpush1.msra.mxu0 0.0
        %441 = vmatprep.subr.mxu0 0.0
        %442 = vmatpush1.msra.mxu0 0.0
        %443 = vmatprep.subr.mxu0 0.0
        %444 = vmatpush1.msra.mxu0 0.0
        %445 = vmatprep.subr.mxu0 0.0
        %446 = vmatpush1.msra.mxu0 0.0
        %447 = vmatprep.subr.mxu0 0.0
        %448 = vmatpush1.msra.mxu0 0.0
        %449 = vmatprep.subr.mxu0 0.0
        %450 = vmatpush1.msra.mxu0 0.0
        %451 = vmatprep.subr.mxu0 0.0
        %452 = vmatpush1.msra.mxu0 0.0
        %453 = vmatprep.subr.mxu0 0.0
        %454 = vmatpush1.msra.mxu0 0.0
        %455 = vmatprep.subr.mxu0 0.0
        %456 = vmatpush1.msra.mxu0 0.0
        %457 = vmatprep.subr.mxu0 0.0
        %458 = vmatpush1.msra.mxu0 0.0
        %459 = vmatprep.subr.mxu0 0.0
        %460 = vmatpush1.msra.mxu0 0.0
        %461 = vmatprep.subr.mxu0 0.0
        %462 = vmatpush1.msra.mxu0 0.0
        %463 = vmatprep.subr.mxu0 0.0
        %464 = vmatpush1.msra.mxu0 0.0
        %465 = vmatprep.subr.mxu0 0.0
        %466 = vmatpush1.msra.mxu0 0.0
        %467 = vmatprep.subr.mxu0 0.0
        %468 = vmatpush1.msra.mxu0 0.0
        %469 = vmatprep.subr.mxu0 0.0
        %470 = vmatpush1.msra.mxu0 0.0
        %471 = vmatprep.subr.mxu0 0.0
        %472 = vmatpush1.msra.mxu0 0.0
        %473 = vmatprep.subr.mxu0 0.0
        %474 = vmatpush1.msra.mxu0 0.0
        %475 = vmatprep.subr.mxu0 0.0
        %476 = vmatpush1.msra.mxu0 0.0
        %477 = vmatprep.subr.mxu0 0.0
        %478 = vmatpush1.msra.mxu0 0.0
        %479 = vmatprep.subr.mxu0 0.0
        %480 = vmatpush1.msra.mxu0 0.0
        %481 = vmatprep.subr.mxu0 0.0
        %482 = vmatpush1.msra.mxu0 0.0
        %483 = vmatprep.subr.mxu0 0.0
        %484 = vmatpush1.msra.mxu0 0.0
        %485 = vmatprep.mubr.f32.mxu0 0.0
        %486 = vmatmul.mubr.f32.gmra.mrb[0].mxu0 %v419
        %v487 = vpop.f32.mrb[0].mxu0
        %v488 = vadd.f32 %v342, %v487
        %v489 = vpop.f32.mrb[0].mxu0
        %490 = vdwg.mxu0
        %vm491 = vcmask 64512
        %v492 = vsel %vm491, %v415, -inf
        %493 = vmax.xlane.f32.xlu0 %v492
        %v494 = vpop.xlane.xlu0 %493
        %v495 = vsel %vm491, %v488, -inf
        %496 = vmax.xlane.f32.xlu0 %v495
        %v497 = vpop.xlane.xlu0 %496
        %v498 = vsub.f32 %v415, %v494
        %v499 = vsub.f32 %v488, %v497
        %v500 = vmul.f32 %v498, 1.442695
        %v501 = vpow.pop %v500
        %v502 = vmul.f32 %v499, 1.442695
        %v503 = vpow.pop %v502
        %v504 = vsel %vm491, %v501, 0.0
        %505 = vadd.xlane.f32.xlu0 %v504
        %v506 = vpop.xlane.xlu0 %505
        %v507 = vsel %vm491, %v503, 0.0
        %508 = vadd.xlane.f32.xlu0 %v507
        %v509 = vpop.xlane.xlu0 %508
        %v510 = vrcp.pop %v506
        %v511 = vrcp.pop %v509
        %v513 = vsel %vm491, %v501, 0
        %515 = vmatprep.subr.mxu0 0.0
        %516 = vmatpush1.msra.mxu0 %v335
        %517 = vmatprep.subr.mxu0 0.0
        %518 = vmatpush1.msra.mxu0 0.0
        %519 = vmatprep.subr.mxu0 0.0
        %520 = vmatpush1.msra.mxu0 0.0
        %521 = vmatprep.subr.mxu0 0.0
        %522 = vmatpush1.msra.mxu0 0.0
        %523 = vmatprep.subr.mxu0 0.0
        %524 = vmatpush1.msra.mxu0 0.0
        %525 = vmatprep.subr.mxu0 0.0
        %526 = vmatpush1.msra.mxu0 0.0
        %527 = vmatprep.subr.mxu0 0.0
        %528 = vmatpush1.msra.mxu0 0.0
        %529 = vmatprep.subr.mxu0 0.0
        %530 = vmatpush1.msra.mxu0 0.0
        %531 = vmatprep.subr.mxu0 0.0
        %532 = vmatpush1.msra.mxu0 0.0
        %533 = vmatprep.subr.mxu0 0.0
        %534 = vmatpush1.msra.mxu0 0.0
        %535 = vmatprep.subr.mxu0 0.0
        %536 = vmatpush1.msra.mxu0 0.0
        %537 = vmatprep.subr.mxu0 0.0
        %538 = vmatpush1.msra.mxu0 0.0
        %539 = vmatprep.subr.mxu0 0.0
        %540 = vmatpush1.msra.mxu0 0.0
        %541 = vmatprep.subr.mxu0 0.0
        %542 = vmatpush1.msra.mxu0 0.0
        %543 = vmatprep.subr.mxu0 0.0
        %544 = vmatpush1.msra.mxu0 0.0
        %545 = vmatprep.subr.mxu0 0.0
        %546 = vmatpush1.msra.mxu0 0.0
        %547 = vmatprep.subr.mxu0 0.0
        %548 = vmatpush1.msra.mxu0 0.0
        %549 = vmatprep.subr.mxu0 0.0
        %550 = vmatpush1.msra.mxu0 0.0
        %551 = vmatprep.subr.mxu0 0.0
        %552 = vmatpush1.msra.mxu0 0.0
        %553 = vmatprep.subr.mxu0 0.0
        %554 = vmatpush1.msra.mxu0 0.0
        %555 = vmatprep.subr.mxu0 0.0
        %556 = vmatpush1.msra.mxu0 0.0
        %557 = vmatprep.subr.mxu0 0.0
        %558 = vmatpush1.msra.mxu0 0.0
        %559 = vmatprep.subr.mxu0 0.0
        %560 = vmatpush1.msra.mxu0 0.0
        %561 = vmatprep.subr.mxu0 0.0
        %562 = vmatpush1.msra.mxu0 0.0
        %563 = vmatprep.subr.mxu0 0.0
        %564 = vmatpush1.msra.mxu0 0.0
        %565 = vmatprep.subr.mxu0 0.0
        %566 = vmatpush1.msra.mxu0 0.0
        %567 = vmatprep.subr.mxu0 0.0
        %568 = vmatpush1.msra.mxu0 0.0
        %569 = vmatprep.subr.mxu0 0.0
        %570 = vmatpush1.msra.mxu0 0.0
        %571 = vmatprep.subr.mxu0 0.0
        %572 = vmatpush1.msra.mxu0 0.0
        %573 = vmatprep.subr.mxu0 0.0
        %574 = vmatpush1.msra.mxu0 0.0
        %575 = vmatprep.subr.mxu0 0.0
        %576 = vmatpush1.msra.mxu0 0.0
        %577 = vmatprep.subr.mxu0 0.0
        %578 = vmatpush1.msra.mxu0 0.0
        %579 = vmatprep.mubr.f32.mxu0 0.0
        %580 = vmatmul.mubr.f32.gmra.mrb[0].mxu0 %v513
        %v581 = vpop.f32.mrb[0].mxu0
        %v582 = vadd.f32 0.0, %v581
        %v583 = vpop.f32.mrb[0].mxu0
        %584 = vdwg.mxu0
        %v586 = vsel %vm491, %v503, 0
        %588 = vmatprep.subr.mxu0 0.0
        %589 = vmatpush1.msra.mxu0 %v336
        %590 = vmatprep.subr.mxu0 0.0
        %591 = vmatpush1.msra.mxu0 0.0
        %592 = vmatprep.subr.mxu0 0.0
        %593 = vmatpush1.msra.mxu0 0.0
        %594 = vmatprep.subr.mxu0 0.0
        %595 = vmatpush1.msra.mxu0 0.0
        %596 = vmatprep.subr.mxu0 0.0
        %597 = vmatpush1.msra.mxu0 0.0
        %598 = vmatprep.subr.mxu0 0.0
        %599 = vmatpush1.msra.mxu0 0.0
        %600 = vmatprep.subr.mxu0 0.0
        %601 = vmatpush1.msra.mxu0 0.0
        %602 = vmatprep.subr.mxu0 0.0
        %603 = vmatpush1.msra.mxu0 0.0
        %604 = vmatprep.subr.mxu0 0.0
        %605 = vmatpush1.msra.mxu0 0.0
        %606 = vmatprep.subr.mxu0 0.0
        %607 = vmatpush1.msra.mxu0 0.0
        %608 = vmatprep.subr.mxu0 0.0
        %609 = vmatpush1.msra.mxu0 0.0
        %610 = vmatprep.subr.mxu0 0.0
        %611 = vmatpush1.msra.mxu0 0.0
        %612 = vmatprep.subr.mxu0 0.0
        %613 = vmatpush1.msra.mxu0 0.0
        %614 = vmatprep.subr.mxu0 0.0
        %615 = vmatpush1.msra.mxu0 0.0
        %616 = vmatprep.subr.mxu0 0.0
        %617 = vmatpush1.msra.mxu0 0.0
        %618 = vmatprep.subr.mxu0 0.0
        %619 = vmatpush1.msra.mxu0 0.0
        %620 = vmatprep.subr.mxu0 0.0
        %621 = vmatpush1.msra.mxu0 0.0
        %622 = vmatprep.subr.mxu0 0.0
        %623 = vmatpush1.msra.mxu0 0.0
        %624 = vmatprep.subr.mxu0 0.0
        %625 = vmatpush1.msra.mxu0 0.0
        %626 = vmatprep.subr.mxu0 0.0
        %627 = vmatpush1.msra.mxu0 0.0
        %628 = vmatprep.subr.mxu0 0.0
        %629 = vmatpush1.msra.mxu0 0.0
        %630 = vmatprep.subr.mxu0 0.0
        %631 = vmatpush1.msra.mxu0 0.0
        %632 = vmatprep.subr.mxu0 0.0
        %633 = vmatpush1.msra.mxu0 0.0
        %634 = vmatprep.subr.mxu0 0.0
        %635 = vmatpush1.msra.mxu0 0.0
        %636 = vmatprep.subr.mxu0 0.0
        %637 = vmatpush1.msra.mxu0 0.0
        %638 = vmatprep.subr.mxu0 0.0
        %639 = vmatpush1.msra.mxu0 0.0
        %640 = vmatprep.subr.mxu0 0.0
        %641 = vmatpush1.msra.mxu0 0.0
        %642 = vmatprep.subr.mxu0 0.0
        %643 = vmatpush1.msra.mxu0 0.0
        %644 = vmatprep.subr.mxu0 0.0
        %645 = vmatpush1.msra.mxu0 0.0
        %646 = vmatprep.subr.mxu0 0.0
        %647 = vmatpush1.msra.mxu0 0.0
        %648 = vmatprep.subr.mxu0 0.0
        %649 = vmatpush1.msra.mxu0 0.0
        %650 = vmatprep.subr.mxu0 0.0
        %651 = vmatpush1.msra.mxu0 0.0
        %652 = vmatprep.mubr.f32.mxu0 0.0
        %653 = vmatmul.mubr.f32.gmra.mrb[0].mxu0 %v586
        %v654 = vpop.f32.mrb[0].mxu0
        %v655 = vadd.f32 0.0, %v654
        %v656 = vpop.f32.mrb[0].mxu0
        %657 = vdwg.mxu0
        %v658 = vmul.f32 %v582, %v510
        %v659 = vmul.f32 %v655, %v511
        %v660 = vld [vmem:[%s4] sm:$0xff]
        %v661 = vld [vmem:[%s4 + $0x8] sm:$0xff]
        %s662 = scalar_lea.vmem %s4, 16
        %v663 = vld [vmem:[%s662] sm:$0xff]
        %v664 = vld [vmem:[%s662 + $0x8] sm:$0xff]
        %v666 = vsel %vm344, %v659, 0
        %668 = vmatprep.subr.mxu0 0.0
        %669 = vmatpush1.msra.mxu0 %v663
        %670 = vmatprep.subr.mxu0 0.0
        %671 = vmatpush1.msra.mxu0 %v664
        %672 = vmatprep.subr.mxu0 0.0
        %673 = vmatpush1.msra.mxu0 0.0
        %674 = vmatprep.subr.mxu0 0.0
        %675 = vmatpush1.msra.mxu0 0.0
        %676 = vmatprep.subr.mxu0 0.0
        %677 = vmatpush1.msra.mxu0 0.0
        %678 = vmatprep.subr.mxu0 0.0
        %679 = vmatpush1.msra.mxu0 0.0
        %680 = vmatprep.subr.mxu0 0.0
        %681 = vmatpush1.msra.mxu0 0.0
        %682 = vmatprep.subr.mxu0 0.0
        %683 = vmatpush1.msra.mxu0 0.0
        %684 = vmatprep.subr.mxu0 0.0
        %685 = vmatpush1.msra.mxu0 0.0
        %686 = vmatprep.subr.mxu0 0.0
        %687 = vmatpush1.msra.mxu0 0.0
        %688 = vmatprep.subr.mxu0 0.0
        %689 = vmatpush1.msra.mxu0 0.0
        %690 = vmatprep.subr.mxu0 0.0
        %691 = vmatpush1.msra.mxu0 0.0
        %692 = vmatprep.subr.mxu0 0.0
        %693 = vmatpush1.msra.mxu0 0.0
        %694 = vmatprep.subr.mxu0 0.0
        %695 = vmatpush1.msra.mxu0 0.0
        %696 = vmatprep.subr.mxu0 0.0
        %697 = vmatpush1.msra.mxu0 0.0
        %698 = vmatprep.subr.mxu0 0.0
        %699 = vmatpush1.msra.mxu0 0.0
        %700 = vmatprep.subr.mxu0 0.0
        %701 = vmatpush1.msra.mxu0 0.0
        %702 = vmatprep.subr.mxu0 0.0
        %703 = vmatpush1.msra.mxu0 0.0
        %704 = vmatprep.subr.mxu0 0.0
        %705 = vmatpush1.msra.mxu0 0.0
        %706 = vmatprep.subr.mxu0 0.0
        %707 = vmatpush1.msra.mxu0 0.0
        %708 = vmatprep.subr.mxu0 0.0
        %709 = vmatpush1.msra.mxu0 0.0
        %710 = vmatprep.subr.mxu0 0.0
        %711 = vmatpush1.msra.mxu0 0.0
        %712 = vmatprep.subr.mxu0 0.0
        %713 = vmatpush1.msra.mxu0 0.0
        %714 = vmatprep.subr.mxu0 0.0
        %715 = vmatpush1.msra.mxu0 0.0
        %716 = vmatprep.subr.mxu0 0.0
        %717 = vmatpush1.msra.mxu0 0.0
        %718 = vmatprep.subr.mxu0 0.0
        %719 = vmatpush1.msra.mxu0 0.0
        %720 = vmatprep.subr.mxu0 0.0
        %721 = vmatpush1.msra.mxu0 0.0
        %722 = vmatprep.subr.mxu0 0.0
        %723 = vmatpush1.msra.mxu0 0.0
        %724 = vmatprep.subr.mxu0 0.0
        %725 = vmatpush1.msra.mxu0 0.0
        %726 = vmatprep.subr.mxu0 0.0
        %727 = vmatpush1.msra.mxu0 0.0
        %728 = vmatprep.subr.mxu0 0.0
        %729 = vmatpush1.msra.mxu0 0.0
        %730 = vmatprep.subr.mxu0 0.0
        %731 = vmatpush1.msra.mxu0 0.0
        %732 = vmatprep.mubr.f32.mxu0 0.0
        %733 = vmatmul.mubr.f32.gmra.mrb[0].mxu0 %v666
        %v734 = vpop.f32.mrb[0].mxu0
        %v735 = vadd.f32 0.0, %v734
        %v736 = vpop.f32.mrb[0].mxu0
        %737 = vdwg.mxu0
        %v739 = vsel %vm344, %v658, 0
        %741 = vmatprep.subr.mxu0 0.0
        %742 = vmatpush1.msra.mxu0 %v660
        %743 = vmatprep.subr.mxu0 0.0
        %744 = vmatpush1.msra.mxu0 %v661
        %745 = vmatprep.subr.mxu0 0.0
        %746 = vmatpush1.msra.mxu0 0.0
        %747 = vmatprep.subr.mxu0 0.0
        %748 = vmatpush1.msra.mxu0 0.0
        %749 = vmatprep.subr.mxu0 0.0
        %750 = vmatpush1.msra.mxu0 0.0
        %751 = vmatprep.subr.mxu0 0.0
        %752 = vmatpush1.msra.mxu0 0.0
        %753 = vmatprep.subr.mxu0 0.0
        %754 = vmatpush1.msra.mxu0 0.0
        %755 = vmatprep.subr.mxu0 0.0
        %756 = vmatpush1.msra.mxu0 0.0
        %757 = vmatprep.subr.mxu0 0.0
        %758 = vmatpush1.msra.mxu0 0.0
        %759 = vmatprep.subr.mxu0 0.0
        %760 = vmatpush1.msra.mxu0 0.0
        %761 = vmatprep.subr.mxu0 0.0
        %762 = vmatpush1.msra.mxu0 0.0
        %763 = vmatprep.subr.mxu0 0.0
        %764 = vmatpush1.msra.mxu0 0.0
        %765 = vmatprep.subr.mxu0 0.0
        %766 = vmatpush1.msra.mxu0 0.0
        %767 = vmatprep.subr.mxu0 0.0
        %768 = vmatpush1.msra.mxu0 0.0
        %769 = vmatprep.subr.mxu0 0.0
        %770 = vmatpush1.msra.mxu0 0.0
        %771 = vmatprep.subr.mxu0 0.0
        %772 = vmatpush1.msra.mxu0 0.0
        %773 = vmatprep.subr.mxu0 0.0
        %774 = vmatpush1.msra.mxu0 0.0
        %775 = vmatprep.subr.mxu0 0.0
        %776 = vmatpush1.msra.mxu0 0.0
        %777 = vmatprep.subr.mxu0 0.0
        %778 = vmatpush1.msra.mxu0 0.0
        %779 = vmatprep.subr.mxu0 0.0
        %780 = vmatpush1.msra.mxu0 0.0
        %781 = vmatprep.subr.mxu0 0.0
        %782 = vmatpush1.msra.mxu0 0.0
        %783 = vmatprep.subr.mxu0 0.0
        %784 = vmatpush1.msra.mxu0 0.0
        %785 = vmatprep.subr.mxu0 0.0
        %786 = vmatpush1.msra.mxu0 0.0
        %787 = vmatprep.subr.mxu0 0.0
        %788 = vmatpush1.msra.mxu0 0.0
        %789 = vmatprep.subr.mxu0 0.0
        %790 = vmatpush1.msra.mxu0 0.0
        %791 = vmatprep.subr.mxu0 0.0
        %792 = vmatpush1.msra.mxu0 0.0
        %793 = vmatprep.subr.mxu0 0.0
        %794 = vmatpush1.msra.mxu0 0.0
        %795 = vmatprep.subr.mxu0 0.0
        %796 = vmatpush1.msra.mxu0 0.0
        %797 = vmatprep.subr.mxu0 0.0
        %798 = vmatpush1.msra.mxu0 0.0
        %799 = vmatprep.subr.mxu0 0.0
        %800 = vmatpush1.msra.mxu0 0.0
        %801 = vmatprep.subr.mxu0 0.0
        %802 = vmatpush1.msra.mxu0 0.0
        %803 = vmatprep.subr.mxu0 0.0
        %804 = vmatpush1.msra.mxu0 0.0
        %805 = vmatprep.mubr.f32.mxu0 0.0
        %806 = vmatmul.mubr.f32.gmra.mrb[0].mxu0 %v739
        %v807 = vpop.f32.mrb[0].mxu0
        %v808 = vadd.f32 %v735, %v807
        %v809 = vpop.f32.mrb[0].mxu0
        %810 = vdwg.mxu0
        %v811 = vld [vmem:[%s5] sm:$0x1]
        %v813 = vlaneseq
        %v814 = vshrl.u32 %v813, 7
        %v815 = vsub.s32 0, %v814
        %v816 = vrot.slane %v811, %v815
        %v818 = vadd.f32 %v808, %v816
        %vm819 = vcmask 261120
        %820 = vst.msk [vmem:[%s307] sm:$0xff] %vm819, %v818
        %s821 = sand.u32 %s190, 1
        %s822 = scalar_lea.sflag [#allocation3], %s821
        %s823 = sand.u32 %s190, 1
        %s824 = smul.addr %s823, 8
        %s825 = scalar_lea.vmem [#allocation2], %s824
        // Predicated region
        $region45: #{tpu_custom_call.1} parent=43 // pred_check
          %p826 = pneg %p200
        $region46: #{tpu_custom_call.1} parent=43 // pred_check_branch
          %828 = sbr.rel (%p826) target = $region48
        $region47: #{tpu_custom_call.1} parent=43 // pred_region
          %s830 = ssub.s32 128, 128
          %831 = vsyncadd %s822, %s830
          %s832 = sadd.s32 %s25, %s24
          %s833 = smul.addr %s832, 128
          %s834 = scalar_lea.hbm %s6, %s833
          %s836 = sshll.u32 %s825, 4
          %s837 = int_to_ptr.vmem [resolvable:$true] %s836
          %839 = dma.vmem_to_hbm [thread:$0]  %s837, 128, %s834, %s822
        $region48: #{tpu_custom_call.1} parent=43 // pred_fallthru
          _
      $region44: #{tpu_custom_call.1} parent=5 // pred_fallthru
        _
      %p840 = scmp.le.s32.totalorder 2, %s15
      // Predicated region
      $region49: #{tpu_custom_call.1} parent=5 // pred_check
        %p841 = pneg %p840
      $region50: #{tpu_custom_call.1} parent=5 // pred_check_branch
        %843 = sbr.rel (%p841) target = $region52
      $region51: #{tpu_custom_call.1} parent=5 // pred_region
        %s844 = ssub.s32 %s15, 2
        // Predicated region
        $region53: #{tpu_custom_call.1} parent=51 // pred_check
          %p845 = pneg %p206
        $region54: #{tpu_custom_call.1} parent=51 // pred_check_branch
          %847 = sbr.rel (%p845) target = $region56
        $region55: #{tpu_custom_call.1} parent=51 // pred_region
          %s848 = sand.u32 %s191, 1
          %s849 = scalar_lea.sflag [#allocation3], %s848
          %s850 = sand.u32 %s191, 1
          %s851 = smul.addr %s850, 8
          %s852 = scalar_lea.vmem [#allocation2], %s851
          %853 = dma.done %s849, 128
        $region56: #{tpu_custom_call.1} parent=51 // pred_fallthru
          _
      $region52: #{tpu_custom_call.1} parent=5 // pred_fallthru
        _
    $region6: #{tpu_custom_call.1} parent=1 // loop_footer
      %s19 = sadd.s32 1, %s15
    $region7: #{tpu_custom_call.1} parent=1 // loop_footer_branch
      %14 = sbr.rel target = $region3
    $region8: #{tpu_custom_call.1} parent=1 // loop_exit
      _
    %854 = vsyncpa [#allocation3], 1
    %s855 = scalar_lea.sflag [#allocation3], 1
    %856 = vsyncpa %s855, 1

</llo_original>
